<compile_context>
chip_gen: v7x
topology: tpu7x:2x2x1
jax: 0.10.0
libtpu: 0.0.40
codegen_flags: <defaults>
</compile_context>

<pallas_src>
import functools

import jax
import jax.numpy as jnp
from jax.experimental import pallas as pl
from jax.experimental.pallas import tpu as pltpu


def _round_up(n, m):
    return ((n + m - 1) // m) * m


def _choose_batch_tile(B, block_b):
    """Pick (TB, B_p): 16-aligned batch tile clamped to the real batch.

    Guarantees >=2 grid steps whenever the (16-aligned) batch allows it, so
    v7x's second TensorCore is used; keeps padding waste to <16 rows for
    small batches instead of padding up to block_b.
    """
    blk = _round_up(max(block_b, 16), 16)
    B16 = _round_up(max(B, 1), 16)
    if B16 > blk:
        TB = blk                              # large batch: several full tiles
    elif B16 >= 32:
        TB = _round_up(B16 // 2, 16)          # split -> >=2 steps (v7x megacore)
    else:
        TB = B16                              # tiny batch: one minimal tile
    B_p = _round_up(B16, TB)
    return TB, B_p


def qnet_kernel(x_ref, w1_ref, b1_ref, w2_ref, b2_ref, o_ref, *, precision):
    # fc1: MXU matmul with f32 accumulation; bias + ReLU in f32 on the VPU.
    h = jnp.dot(x_ref[...], w1_ref[...],
                preferred_element_type=jnp.float32, precision=precision)
    h = jnp.maximum(h + b1_ref[...], 0.0)
    # fc2: cast activations to the matmul operand dtype, accumulate in f32.
    h = h.astype(w2_ref.dtype)
    out = jnp.dot(h, w2_ref[...],
                  preferred_element_type=jnp.float32, precision=precision)
    o_ref[...] = (out + b2_ref[...]).astype(o_ref.dtype)


@functools.partial(jax.jit,
                   static_argnames=("block_b", "compute_dtype", "out_dtype"))
def qnet_forward(x, w1, b1, w2, b2, *, block_b=1024,
                 compute_dtype=jnp.bfloat16, out_dtype=None):
    """Qnet forward: relu(x @ w1 + b1) @ w2 + b2.

    x : [B, S]   w1: [S, H]   b1: [H]   w2: [H, A]   b2: [A]   -> [B, A]
    Weights are stored [in_features, out_features] (PyTorch Linear weight
    transposed), so both matmuls are plain x @ W + b.

    compute_dtype: bf16 (default, fastest HBM stream) or f32 (uses MXU
    Precision.HIGHEST; near-exact numerics for Q-targets).
    out_dtype: defaults to x.dtype; pass jnp.bfloat16 to halve output traffic.
    """
    B, S = x.shape
    H = w1.shape[1]
    A = w2.shape[1]

    cd = jnp.dtype(compute_dtype)
    od = jnp.dtype(out_dtype) if out_dtype is not None else x.dtype
    precision = jax.lax.Precision.HIGHEST if cd == jnp.float32 else None

    # ---- Host-side zero padding to hardware-native tiles ------------------
    # Exact: padded input features are 0, padded hidden units have zero
    # weight/bias -> relu(0)=0 contributes nothing to fc2; padded output
    # columns / batch rows are sliced off below.
    S_p = _round_up(S, 128)
    H_p = _round_up(H, 128)
    A_p = _round_up(A, 128)
    TB, B_p = _choose_batch_tile(B, block_b)

    x_p = jnp.pad(x.astype(cd), ((0, B_p - B), (0, S_p - S)))
    w1_p = jnp.pad(w1.astype(cd), ((0, S_p - S), (0, H_p - H)))
    w2_p = jnp.pad(w2.astype(cd), ((0, H_p - H), (0, A_p - A)))
    b1_p = jnp.pad(b1.reshape(1, -1).astype(jnp.float32),
                   ((0, 0), (0, H_p - H)))
    b2_p = jnp.pad(b2.reshape(1, -1).astype(jnp.float32),
                   ((0, 0), (0, A_p - A)))

    # ---- Grid over the batch dimension ------------------------------------
    grid = (B_p // TB,)
    resident = lambda shp: pl.BlockSpec(shp, lambda i: (0, 0))

    out_p = pl.pallas_call(
        functools.partial(qnet_kernel, precision=precision),
        out_shape=jax.ShapeDtypeStruct((B_p, A_p), od),
        grid=grid,
        in_specs=[
            pl.BlockSpec((TB, S_p), lambda i: (i, 0)),  # x: streamed per step
            resident((S_p, H_p)),                       # w1 (VMEM-resident)
            resident((1, H_p)),                         # b1
            resident((H_p, A_p)),                       # w2
            resident((1, A_p)),                         # b2
        ],
        out_specs=pl.BlockSpec((TB, A_p), lambda i: (i, 0)),  # lane-dense
        compiler_params=pltpu.CompilerParams(
            # Batch axis is embarrassingly parallel -> megacore on v7x.
            dimension_semantics=("parallel",),
            # Let XLA fuse the pad/convert of x into the pallas operand so the
            # padded copy is never materialized in HBM.
            allow_input_fusion=[True, False, False, False, False],
        ),
    )(x_p, w1_p, b1_p, w2_p, b2_p)

    return out_p[:B, :A]


def qnet_reference(x, w1, b1, w2, b2):
    h = jnp.maximum(x @ w1 + b1.reshape(1, -1), 0.0)
    return h @ w2 + b2.reshape(1, -1)


if __name__ == "__main__":
    # Shapes implied by Qnet(state_dim, hidden_dim, action_dim).
    batch, state_dim, hidden_dim, action_dim = 2, 4, 32, 2

    key = jax.random.PRNGKey(0)
    kx, k1, kb1, k2, kb2, kx2 = jax.random.split(key, 6)

    x = jax.random.normal(kx, (batch, state_dim), dtype=jnp.float32)

    # Deterministic synthetic parameters (PyTorch-style uniform bound).
    bound1 = 1.0 / (state_dim ** 0.5)
    w1 = jax.random.uniform(k1, (state_dim, hidden_dim), jnp.float32,
                            minval=-bound1, maxval=bound1)
    b1 = jax.random.uniform(kb1, (hidden_dim,), jnp.float32,
                            minval=-bound1, maxval=bound1)
    bound2 = 1.0 / (hidden_dim ** 0.5)
    w2 = jax.random.uniform(k2, (hidden_dim, action_dim), jnp.float32,
                            minval=-bound2, maxval=bound2)
    b2 = jax.random.uniform(kb2, (action_dim,), jnp.float32,
                            minval=-bound2, maxval=bound2)

    ref = qnet_reference(x, w1, b1, w2, b2)

    # 1) Default fast path: bf16 matmul operands, f32 accumulation/output.
    out = jax.block_until_ready(qnet_forward(x, w1, b1, w2, b2))
    assert out.shape == (batch, action_dim)
    assert out.dtype == jnp.float32
    assert jnp.allclose(out, ref, atol=5e-2, rtol=5e-2), "bf16 path mismatch"

    # 2) High-precision path: f32 operands, Precision.HIGHEST on the MXU.
    out_hp = jax.block_until_ready(
        qnet_forward(x, w1, b1, w2, b2, compute_dtype=jnp.float32))
    assert jnp.allclose(out_hp, ref, atol=1e-5, rtol=1e-5), "f32 path mismatch"

    # 3) Larger batch exercising the multi-step (>=2) batch grid.
    xb = jax.random.normal(kx2, (100, state_dim), dtype=jnp.float32)
    out_b = jax.block_until_ready(qnet_forward(xb, w1, b1, w2, b2))
    ref_b = qnet_reference(xb, w1, b1, w2, b2)
    assert out_b.shape == (100, action_dim)
    assert jnp.allclose(out_b, ref_b, atol=5e-2, rtol=5e-2), "batch mismatch"

    print("KERNEL_OK")
</pallas_src>

<mosaic_0001>
module attributes {stable_mosaic.version = 11 : i64} {
  func.func @qnet_kernel(%arg0: i32, %arg1: memref<16x128xbf16, #tpu.memory_space<vmem>>, %arg2: memref<128x128xbf16, #tpu.memory_space<vmem>>, %arg3: memref<1x128xf32, #tpu.memory_space<vmem>>, %arg4: memref<128x128xbf16, #tpu.memory_space<vmem>>, %arg5: memref<1x128xf32, #tpu.memory_space<vmem>>, %arg6: memref<16x128xf32, #tpu.memory_space<vmem>>) attributes {dimension_semantics = [#tpu.dimension_semantics<parallel>], iteration_bounds = array<i64: 1>, scalar_prefetch = 0 : i64, scratch_operands = 0 : i64, tpu.core_type = #tpu.core_type<tc>, window_params = [{transform_indices = @transform_0, window_bounds = array<i64: 16, 128>}, {pipeline_mode = #tpu.pipeline_mode<synchronous>, transform_indices = @transform_1, window_bounds = array<i64: 128, 128>}, {pipeline_mode = #tpu.pipeline_mode<synchronous>, transform_indices = @transform_2, window_bounds = array<i64: 1, 128>}, {pipeline_mode = #tpu.pipeline_mode<synchronous>, transform_indices = @transform_3, window_bounds = array<i64: 128, 128>}, {pipeline_mode = #tpu.pipeline_mode<synchronous>, transform_indices = @transform_4, window_bounds = array<i64: 1, 128>}, {transform_indices = @transform_5, window_bounds = array<i64: 16, 128>}]} {
    %c0 = arith.constant 0 : index
    %c0_0 = arith.constant 0 : index
    %0 = vector.load %arg1[%c0, %c0_0] : memref<16x128xbf16, #tpu.memory_space<vmem>>, vector<16x128xbf16>
    %c0_1 = arith.constant 0 : index
    %c0_2 = arith.constant 0 : index
    %1 = vector.load %arg2[%c0_1, %c0_2] : memref<128x128xbf16, #tpu.memory_space<vmem>>, vector<128x128xbf16>
    %cst = arith.constant dense<0.000000e+00> : vector<16x128xf32>
    %2 = tpu.matmul %0, %1, %cst {dimension_numbers = #tpu.dot_dimension_numbers<[1], [0], [0], [1], [0, 0, 1, 1], [], []>} : vector<16x128xbf16>, vector<128x128xbf16>, vector<16x128xf32> -> vector<16x128xf32>
    %c0_3 = arith.constant 0 : index
    %c0_4 = arith.constant 0 : index
    %3 = vector.load %arg3[%c0_3, %c0_4] : memref<1x128xf32, #tpu.memory_space<vmem>>, vector<1x128xf32>
    %4 = vector.broadcast %3 : vector<1x128xf32> to vector<16x128xf32>
    %5 = arith.addf %2, %4 : vector<16x128xf32>
    %cst_5 = arith.constant 0.000000e+00 : f32
    %6 = vector.broadcast %cst_5 : f32 to vector<16x128xf32>
    %7 = arith.maximumf %5, %6 : vector<16x128xf32>
    %8 = arith.truncf %7 : vector<16x128xf32> to vector<16x128xbf16>
    %c0_6 = arith.constant 0 : index
    %c0_7 = arith.constant 0 : index
    %9 = vector.load %arg4[%c0_6, %c0_7] : memref<128x128xbf16, #tpu.memory_space<vmem>>, vector<128x128xbf16>
    %cst_8 = arith.constant dense<0.000000e+00> : vector<16x128xf32>
    %10 = tpu.matmul %8, %9, %cst_8 {dimension_numbers = #tpu.dot_dimension_numbers<[1], [0], [0], [1], [0, 0, 1, 1], [], []>} : vector<16x128xbf16>, vector<128x128xbf16>, vector<16x128xf32> -> vector<16x128xf32>
    %c0_9 = arith.constant 0 : index
    %c0_10 = arith.constant 0 : index
    %11 = vector.load %arg5[%c0_9, %c0_10] : memref<1x128xf32, #tpu.memory_space<vmem>>, vector<1x128xf32>
    %12 = vector.broadcast %11 : vector<1x128xf32> to vector<16x128xf32>
    %13 = arith.addf %10, %12 : vector<16x128xf32>
    %c0_11 = arith.constant 0 : index
    %c0_12 = arith.constant 0 : index
    %14 = vector.load %arg6[%c0_11, %c0_12] : memref<16x128xf32, #tpu.memory_space<vmem>>, vector<16x128xf32>
    tpu.vector_store %arg6[%c0_11, %c0_12], %13 {strides = array<i32>} : memref<16x128xf32, #tpu.memory_space<vmem>>, vector<16x128xf32>,
    return
  }
  func.func @transform_0(%arg0: i32) -> (i32, i32) {
    %c0_i32 = arith.constant 0 : i32
    %c0_i32_0 = arith.constant 0 : i32
    return %arg0, %c0_i32 : i32, i32
  }
  func.func @transform_1(%arg0: i32) -> (i32, i32) {
    %c0_i32 = arith.constant 0 : i32
    %c0_i32_0 = arith.constant 0 : i32
    %c0_i32_1 = arith.constant 0 : i32
    return %c0_i32, %c0_i32_0 : i32, i32
  }
  func.func @transform_2(%arg0: i32) -> (i32, i32) {
    %c0_i32 = arith.constant 0 : i32
    %c0_i32_0 = arith.constant 0 : i32
    %c0_i32_1 = arith.constant 0 : i32
    return %c0_i32, %c0_i32_0 : i32, i32
  }
  func.func @transform_3(%arg0: i32) -> (i32, i32) {
    %c0_i32 = arith.constant 0 : i32
    %c0_i32_0 = arith.constant 0 : i32
    %c0_i32_1 = arith.constant 0 : i32
    return %c0_i32, %c0_i32_0 : i32, i32
  }
  func.func @transform_4(%arg0: i32) -> (i32, i32) {
    %c0_i32 = arith.constant 0 : i32
    %c0_i32_0 = arith.constant 0 : i32
    %c0_i32_1 = arith.constant 0 : i32
    return %c0_i32, %c0_i32_0 : i32, i32
  }
  func.func @transform_5(%arg0: i32) -> (i32, i32) {
    %c0_i32 = arith.constant 0 : i32
    %c0_i32_0 = arith.constant 0 : i32
    return %arg0, %c0_i32 : i32, i32
  }
}

</mosaic_0001>

<llo_original>
// kernel: qnet_forward.2
$region0: #{qnet_forward.2}
  #allocation0 [shape = 'u32[]', space=smem, size = 0x4, offset = 0x4, fixed_abs, tag = 'smem constant byte address 0x4 - core index']
  #allocation1 [shape = 'u32[144,128]{1,0:T(1,128)}', space=vmem, size = 0x12000, scoped, tag = 'internal scratch']
  #allocation2 [shape = 'u32[2048]{0}', space=vmem, size = 0x2000, scoped, tag = 'scoped memory for qnet_forward.2']
  #allocation3 [shape = 'u32[2048]{0}', space=vmem, size = 0x2000, scoped, tag = 'scoped memory for qnet_forward.2']
  #allocation4 [shape = 'u32[2048]{0}', space=vmem, size = 0x2000, scoped, tag = 'scoped memory for qnet_forward.2']
  #allocation5 [shape = 'u32[2048]{0}', space=vmem, size = 0x2000, scoped, tag = 'scoped memory for qnet_forward.2']
  #allocation6 [shape = 'u32[2048]{0}', space=vmem, size = 0x2000, scoped, tag = 'scoped memory for qnet_forward.2']
  %s0 = inlined_call_operand.vmem [shape: bf16[128,128], index: 0, kind: input, shape index: {}]
  %s1 = inlined_call_operand.vmem [shape: f32[1,128], index: 1, kind: input, shape index: {}]
  %s2 = inlined_call_operand.vmem [shape: bf16[128,128], index: 2, kind: input, shape index: {}]
  %s3 = inlined_call_operand.vmem [shape: f32[1,128], index: 3, kind: input, shape index: {}]
  %s4 = inlined_call_operand.vmem [shape: bf16[2,4], index: 4, kind: input, shape index: {}]
  %s5 = inlined_call_operand.<no memory space> [shape: bf16[], index: 5, kind: input, shape index: {}]
  %s6 = inlined_call_operand.vmem [shape: f32[16,128], index: 6, kind: output, shape index: {}]
  %s7 = sld [smem:[#allocation0]]
  $region30: #{qnet_forward.2} parent=0
    _
  %s9 = ssub.s32 1, %s7
  %s10 = scalar_select 0, %s9, %s7
  %v11 = vstv %s5
  %v12 = vunpack.i.l.bf16 %v11
  %v14 = vunpack.i.h.bf16 %v11
  $region1: #{qnet_forward.2} parent=0
    #allocation7 [shape = 'u8[4096]{0}', space=vmem, size = 0x1000, dematerialized = true, scoped, tag = 'FusionAdapter Buffer %fusion.1 = bf16[16,128]{1,0:T(8,128)(2,1)} fusion(%param_4.1, %param_5), kind=kLoop, calls=%fused_computation.1.clone, metadata={op_name="jit(qnet_forward)/jit(_pad)/pad" stack_frame_id=8}']
    // Predicated region
    $region2: #{qnet_forward.2} parent=1 // pred_check
      _
    $region3: #{qnet_forward.2} parent=1 // pred_check_branch
      %17 = sbr.rel (0) target = $region5
    $region4: #{qnet_forward.2} parent=1 // pred_region
      _
    $region5: #{qnet_forward.2} parent=1 // pred_fallthru
      _
    // Predicated region
    $region6: #{qnet_forward.2} parent=1 // pred_check
      _
    $region7: #{qnet_forward.2} parent=1 // pred_check_branch
      %19 = sbr.rel (0) target = $region9
    $region8: #{qnet_forward.2} parent=1 // pred_region
      _
    $region9: #{qnet_forward.2} parent=1 // pred_fallthru
      _
    // Predicated region
    $region10: #{qnet_forward.2} parent=1 // pred_check
      _
    $region11: #{qnet_forward.2} parent=1 // pred_check_branch
      %21 = sbr.rel (0) target = $region13
    $region12: #{qnet_forward.2} parent=1 // pred_region
      _
    $region13: #{qnet_forward.2} parent=1 // pred_fallthru
      _
    // Predicated region
    $region14: #{qnet_forward.2} parent=1 // pred_check
      _
    $region15: #{qnet_forward.2} parent=1 // pred_check_branch
      %23 = sbr.rel (0) target = $region17
    $region16: #{qnet_forward.2} parent=1 // pred_region
      _
    $region17: #{qnet_forward.2} parent=1 // pred_fallthru
      _
    // Predicated region
    $region18: #{qnet_forward.2} parent=1 // pred_check
      _
    $region19: #{qnet_forward.2} parent=1 // pred_check_branch
      %25 = sbr.rel (0) target = $region21
    $region20: #{qnet_forward.2} parent=1 // pred_region
      _
    $region21: #{qnet_forward.2} parent=1 // pred_fallthru
      _
    %s27 = sor.u32 3, 1
    %s28 = sand.u32 %s27, 1
    %v29 = vld [vmem:[%s4] sm:%s28]
    %v30 = vunpack.c.l.bf16 %v29
    %v31 = vunpack.c.h.bf16 %v29
    %v32 = vlaneseq
    %v33 = vshrl.u32 %v32, 7
    %vm35 = vcmp.lt.s32.totalorder %v33, 2
    %v36 = vsel %vm35, %v30, %v12
    %v37 = vlaneseq
    %v38 = vand.u32 %v37, 127
    %vm40 = vcmp.lt.s32.totalorder %v38, 4
    %v41 = vsel %vm40, %v36, %v12
    %v42 = vpack.c.bf16 0.0, %v41
    %44 = vst [vmem:[#allocation7] sm:$0xf] %v42
    %s45 = scalar_lea.vmem [#allocation7], 4
    %v46 = vpack.c.bf16 0.0, %v12
    %48 = vst [vmem:[%s45] sm:$0xf] %v46
    %v50 = vld [vmem:[#allocation7] sm:$0xf]
    %v51 = vld [vmem:[#allocation7 + $0x4] sm:$0xf]
    %v52 = vld [vmem:[%s0] sm:$0xf]
    %v53 = vld [vmem:[%s0 + $0x4] sm:$0xf]
    %v54 = vld [vmem:[%s0 + $0x8] sm:$0xf]
    %v55 = vld [vmem:[%s0 + $0xc] sm:$0xf]
    %v56 = vld [vmem:[%s0 + $0x10] sm:$0xf]
    %v57 = vld [vmem:[%s0 + $0x14] sm:$0xf]
    %v58 = vld [vmem:[%s0 + $0x18] sm:$0xf]
    %v59 = vld [vmem:[%s0 + $0x1c] sm:$0xf]
    %v60 = vld [vmem:[%s0 + $0x20] sm:$0xf]
    %v61 = vld [vmem:[%s0 + $0x24] sm:$0xf]
    %v62 = vld [vmem:[%s0 + $0x28] sm:$0xf]
    %v63 = vld [vmem:[%s0 + $0x2c] sm:$0xf]
    %v64 = vld [vmem:[%s0 + $0x30] sm:$0xf]
    %v65 = vld [vmem:[%s0 + $0x34] sm:$0xf]
    %v66 = vld [vmem:[%s0 + $0x38] sm:$0xf]
    %v67 = vld [vmem:[%s0 + $0x3c] sm:$0xf]
    %v68 = vld [vmem:[%s1] sm:$0x1]
    %v70 = vlaneseq
    %v71 = vshrl.u32 %v70, 7
    %v72 = vsub.s32 0, %v71
    %v73 = vrot.slane %v68, %v72
    %v77 = vunpack.c.l.b16 %v50
    %v78 = vunpack.c.l.b16 %v51
    %v79 = vpack.c.b16 %v78, %v77
    %v97 = vunpack.c.l.b16 %v52
    %v98 = vunpack.c.l.b16 %v53
    %v99 = vunpack.c.l.b16 %v54
    %v100 = vunpack.c.l.b16 %v55
    %v101 = vunpack.c.l.b16 %v56
    %v102 = vunpack.c.l.b16 %v57
    %v103 = vunpack.c.l.b16 %v58
    %v104 = vunpack.c.l.b16 %v59
    %v105 = vunpack.c.l.b16 %v60
    %v106 = vunpack.c.l.b16 %v61
    %v107 = vunpack.c.l.b16 %v62
    %v108 = vunpack.c.l.b16 %v63
    %v109 = vunpack.c.l.b16 %v64
    %v110 = vunpack.c.l.b16 %v65
    %v111 = vunpack.c.l.b16 %v66
    %v112 = vunpack.c.l.b16 %v67
    %v113 = vpack.c.b16 %v98, %v97
    %v114 = vpack.c.b16 %v100, %v99
    %v115 = vpack.c.b16 %v102, %v101
    %v116 = vpack.c.b16 %v104, %v103
    %v117 = vpack.c.b16 %v106, %v105
    %v118 = vpack.c.b16 %v108, %v107
    %v119 = vpack.c.b16 %v110, %v109
    %v120 = vpack.c.b16 %v112, %v111
    %129 = vmatprep.subr.bf16.mxu0 0
    %130 = vmatpush1.bf16.msra.mxu0 %v113
    %131 = vmatprep.subr.bf16.mxu0 0
    %132 = vmatpush1.bf16.msra.mxu0 %v114
    %133 = vmatprep.subr.bf16.mxu0 0
    %134 = vmatpush1.bf16.msra.mxu0 %v115
    %135 = vmatprep.subr.bf16.mxu0 0
    %136 = vmatpush1.bf16.msra.mxu0 %v116
    %137 = vmatprep.subr.bf16.mxu0 0
    %138 = vmatpush1.bf16.msra.mxu0 %v117
    %139 = vmatprep.subr.bf16.mxu0 0
    %140 = vmatpush1.bf16.msra.mxu0 %v118
    %141 = vmatprep.subr.bf16.mxu0 0
    %142 = vmatpush1.bf16.msra.mxu0 %v119
    %143 = vmatprep.subr.bf16.mxu0 0
    %144 = vmatpush1.bf16.msra.mxu0 %v120
    %145 = vmatprep.subr.bf16.mxu0 0
    %146 = vmatpush1.bf16.msra.mxu0 0
    %147 = vmatprep.subr.bf16.mxu0 0
    %148 = vmatpush1.bf16.msra.mxu0 0
    %149 = vmatprep.subr.bf16.mxu0 0
    %150 = vmatpush1.bf16.msra.mxu0 0
    %151 = vmatprep.subr.bf16.mxu0 0
    %152 = vmatpush1.bf16.msra.mxu0 0
    %153 = vmatprep.subr.bf16.mxu0 0
    %154 = vmatpush1.bf16.msra.mxu0 0
    %155 = vmatprep.subr.bf16.mxu0 0
    %156 = vmatpush1.bf16.msra.mxu0 0
    %157 = vmatprep.subr.bf16.mxu0 0
    %158 = vmatpush1.bf16.msra.mxu0 0
    %159 = vmatprep.subr.bf16.mxu0 0
    %160 = vmatpush1.bf16.msra.mxu0 0
    %161 = vmatprep.mubr.bf16.mxu0 0
    %162 = vmatmul.mubr.bf16.gmra.mrb[0].mxu0 %v79
    %v163 = vpop.f32.mrb[0].mxu0
    %v164 = vadd.f32 %v73, %v163
    %v165 = vpop.f32.mrb[0].mxu0
    %v166 = vpop.f32.mrb[0].mxu0
    %v167 = vadd.f32 %v73, %v166
    %v168 = vpop.f32.mrb[0].mxu0
    %169 = vdwg.mxu0
    %v170 = vmax.f32 %v164, 0.0
    %v171 = vmax.f32 %v167, 0.0
    %v172 = vpack.c.bf16 %v171, %v170
    %v173 = vld [vmem:[%s2] sm:$0xf]
    %v174 = vld [vmem:[%s2 + $0x4] sm:$0xf]
    %v175 = vld [vmem:[%s2 + $0x8] sm:$0xf]
    %v176 = vld [vmem:[%s2 + $0xc] sm:$0xf]
    %v177 = vld [vmem:[%s2 + $0x10] sm:$0xf]
    %v178 = vld [vmem:[%s2 + $0x14] sm:$0xf]
    %v179 = vld [vmem:[%s2 + $0x18] sm:$0xf]
    %v180 = vld [vmem:[%s2 + $0x1c] sm:$0xf]
    %v181 = vld [vmem:[%s2 + $0x20] sm:$0xf]
    %v182 = vld [vmem:[%s2 + $0x24] sm:$0xf]
    %v183 = vld [vmem:[%s2 + $0x28] sm:$0xf]
    %v184 = vld [vmem:[%s2 + $0x2c] sm:$0xf]
    %v185 = vld [vmem:[%s2 + $0x30] sm:$0xf]
    %v186 = vld [vmem:[%s2 + $0x34] sm:$0xf]
    %v187 = vld [vmem:[%s2 + $0x38] sm:$0xf]
    %v188 = vld [vmem:[%s2 + $0x3c] sm:$0xf]
    %v189 = vld [vmem:[%s3] sm:$0x1]
    %v191 = vlaneseq
    %v192 = vshrl.u32 %v191, 7
    %v193 = vsub.s32 0, %v192
    %v194 = vrot.slane %v189, %v193
    %v212 = vunpack.c.l.b16 %v173
    %v213 = vunpack.c.l.b16 %v174
    %v214 = vunpack.c.l.b16 %v175
    %v215 = vunpack.c.l.b16 %v176
    %v216 = vunpack.c.l.b16 %v177
    %v217 = vunpack.c.l.b16 %v178
    %v218 = vunpack.c.l.b16 %v179
    %v219 = vunpack.c.l.b16 %v180
    %v220 = vunpack.c.l.b16 %v181
    %v221 = vunpack.c.l.b16 %v182
    %v222 = vunpack.c.l.b16 %v183
    %v223 = vunpack.c.l.b16 %v184
    %v224 = vunpack.c.l.b16 %v185
    %v225 = vunpack.c.l.b16 %v186
    %v226 = vunpack.c.l.b16 %v187
    %v227 = vunpack.c.l.b16 %v188
    %v228 = vpack.c.b16 %v213, %v212
    %v229 = vpack.c.b16 %v215, %v214
    %v230 = vpack.c.b16 %v217, %v216
    %v231 = vpack.c.b16 %v219, %v218
    %v232 = vpack.c.b16 %v221, %v220
    %v233 = vpack.c.b16 %v223, %v222
    %v234 = vpack.c.b16 %v225, %v224
    %v235 = vpack.c.b16 %v227, %v226
    %244 = vmatprep.subr.bf16.mxu0 0
    %245 = vmatpush1.bf16.msra.mxu0 %v228
    %246 = vmatprep.subr.bf16.mxu0 0
    %247 = vmatpush1.bf16.msra.mxu0 %v229
    %248 = vmatprep.subr.bf16.mxu0 0
    %249 = vmatpush1.bf16.msra.mxu0 %v230
    %250 = vmatprep.subr.bf16.mxu0 0
    %251 = vmatpush1.bf16.msra.mxu0 %v231
    %252 = vmatprep.subr.bf16.mxu0 0
    %253 = vmatpush1.bf16.msra.mxu0 %v232
    %254 = vmatprep.subr.bf16.mxu0 0
    %255 = vmatpush1.bf16.msra.mxu0 %v233
    %256 = vmatprep.subr.bf16.mxu0 0
    %257 = vmatpush1.bf16.msra.mxu0 %v234
    %258 = vmatprep.subr.bf16.mxu0 0
    %259 = vmatpush1.bf16.msra.mxu0 %v235
    %260 = vmatprep.subr.bf16.mxu0 0
    %261 = vmatpush1.bf16.msra.mxu0 0
    %262 = vmatprep.subr.bf16.mxu0 0
    %263 = vmatpush1.bf16.msra.mxu0 0
    %264 = vmatprep.subr.bf16.mxu0 0
    %265 = vmatpush1.bf16.msra.mxu0 0
    %266 = vmatprep.subr.bf16.mxu0 0
    %267 = vmatpush1.bf16.msra.mxu0 0
    %268 = vmatprep.subr.bf16.mxu0 0
    %269 = vmatpush1.bf16.msra.mxu0 0
    %270 = vmatprep.subr.bf16.mxu0 0
    %271 = vmatpush1.bf16.msra.mxu0 0
    %272 = vmatprep.subr.bf16.mxu0 0
    %273 = vmatpush1.bf16.msra.mxu0 0
    %274 = vmatprep.subr.bf16.mxu0 0
    %275 = vmatpush1.bf16.msra.mxu0 0
    %276 = vmatprep.mubr.bf16.mxu0 0
    %277 = vmatmul.mubr.bf16.gmra.mrb[0].mxu0 %v172
    %v278 = vpop.f32.mrb[0].mxu0
    %v279 = vadd.f32 %v194, %v278
    %v280 = vpop.f32.mrb[0].mxu0
    %v281 = vpop.f32.mrb[0].mxu0
    %v282 = vadd.f32 %v194, %v281
    %v283 = vpop.f32.mrb[0].mxu0
    %284 = vdwg.mxu0
    %285 = vst [vmem:[%s6] sm:$0xff] %v279
    %286 = vst [vmem:[%s6 + $0x8] sm:$0xff] %v282
    // Predicated region
    $region22: #{qnet_forward.2} parent=1 // pred_check
      _
    $region23: #{qnet_forward.2} parent=1 // pred_check_branch
      %288 = sbr.rel (0) target = $region25
    $region24: #{qnet_forward.2} parent=1 // pred_region
      _
    $region25: #{qnet_forward.2} parent=1 // pred_fallthru
      _
    // Predicated region
    $region26: #{qnet_forward.2} parent=1 // pred_check
      _
    $region27: #{qnet_forward.2} parent=1 // pred_check_branch
      %290 = sbr.rel (0) target = $region29
    $region28: #{qnet_forward.2} parent=1 // pred_region
      _
    $region29: #{qnet_forward.2} parent=1 // pred_fallthru
      _

</llo_original>
